<compile_context>
chip_gen: v5e
topology: v5e:2x2
jax: 0.10.0
libtpu: 0.0.40
codegen_flags: <defaults>
</compile_context>

<pallas_src>
import jax
import jax.numpy as jnp
from jax.experimental import pallas as pl
from jax.experimental.pallas import tpu as pltpu

LANE = 128      # vreg lane width (last dim)
SUBLANE = 8     # vreg sublane count (second-to-last dim, f32)


def _round_up(n, m):
    return ((n + m - 1) // m) * m


# ---------------------------------------------------------------------------
# Kernel: two MXU matmuls (bf16 operands, f32 accumulate) + f32 VPU/EUP
# epilogue on the current batch tile resident in VMEM.
# ---------------------------------------------------------------------------
def encoder_kernel(x_ref, w1_ref, b1_ref, w2_ref, b2_ref, o_ref):
    latent_dim = o_ref.shape[-1]
    x = x_ref[...].astype(jnp.bfloat16)                 # in-kernel cast (VPU)
    h = jnp.dot(x, w1_ref[...], preferred_element_type=jnp.float32)
    h = jnp.maximum(h + b1_ref[...], 0.0)               # bias + ReLU, f32 (v5e-safe)
    z = jnp.dot(h.astype(jnp.bfloat16), w2_ref[...],
                preferred_element_type=jnp.float32)
    # Epilogue only on the real latent lanes; store the true-width output.
    z = z[:, :latent_dim] + b2_ref[...]
    o_ref[...] = jnp.tanh(z).astype(o_ref.dtype)


# ---------------------------------------------------------------------------
# One-time parameter prep (hoisted out of the per-call path so pad/cast HBM
# passes are not re-emitted every forward call).
# ---------------------------------------------------------------------------
def prepare_params(w1, b1, w2, b2):
    """Lane-pad hidden/latent dims and cast weights to bf16.
    Zero padding is numerically transparent: padded b1 lanes are zero so
    ReLU(0)=0 there, and padded W2 rows/cols are zero so they add nothing."""
    input_dim, hidden_dim = w1.shape
    latent_dim = w2.shape[1]
    hid_p = _round_up(hidden_dim, LANE)
    lat_p = _round_up(latent_dim, LANE)

    w1_p = jnp.zeros((input_dim, hid_p), jnp.bfloat16)
    w1_p = w1_p.at[:, :hidden_dim].set(w1.astype(jnp.bfloat16))
    b1_p = jnp.zeros((1, hid_p), jnp.float32)
    b1_p = b1_p.at[:, :hidden_dim].set(b1.reshape(1, hidden_dim))
    w2_p = jnp.zeros((hid_p, lat_p), jnp.bfloat16)
    w2_p = w2_p.at[:hidden_dim, :latent_dim].set(w2.astype(jnp.bfloat16))
    b2_p = b2.reshape(1, latent_dim).astype(jnp.float32)
    return (w1_p, b1_p, w2_p, b2_p, hidden_dim, latent_dim)


def _vmem_budget_bytes():
    try:
        cap = pltpu.get_tpu_info().vmem_capacity_bytes   # 64 MiB v7x, 128 MiB v5e/v6e
    except Exception:
        cap = 64 * 1024 * 1024                           # conservative guardrail
    return min(int(cap * 0.6), 96 * 1024 * 1024)


def _pick_batch_tile(B, input_dim, hid_p, lat_p, budget_bytes):
    """Largest batch tile (multiple of 8, <= 2048) whose pipelined working set
    fits the VMEM budget, targeting >= 2 grid steps so both v7x TensorCores
    get work (the extra grid step is near-free on single-TC v5e/v6e)."""
    tile = _round_up(pl.cdiv(B, 2), SUBLANE) if B > SUBLANE else SUBLANE
    tile = min(tile, 2048)
    fixed = (2 * 2 * (input_dim * hid_p + hid_p * lat_p)   # bf16 weights, double-buffered
             + 2 * 4 * (hid_p + lat_p))                    # f32 biases, double-buffered
    per_row = (2 * input_dim * 4        # x tile (f32), double-buffered
               + 2 * lat_p * 4          # out tile (lane-padded in VMEM), double-buffered
               + hid_p * (4 + 2)        # h f32 + bf16 re-cast
               + lat_p * 4)             # z f32
    while tile > SUBLANE and fixed + tile * per_row > budget_bytes:
        tile -= SUBLANE
    return max(tile, SUBLANE)


def encoder_forward(x, params, *, batch_tile=None):
    """x: [B, input_dim] f32.  params: output of prepare_params().
    Returns [B, latent_dim] f32."""
    w1_p, b1_p, w2_p, b2_p, hidden_dim, latent_dim = params
    B, input_dim = x.shape
    hid_p = w1_p.shape[1]
    lat_p = w2_p.shape[1]

    budget = _vmem_budget_bytes()
    if batch_tile is None:
        batch_tile = _pick_batch_tile(B, input_dim, hid_p, lat_p, budget)
    batch_tile = max(_round_up(batch_tile, SUBLANE), SUBLANE)
    grid = (pl.cdiv(B, batch_tile),)    # partial last block handled by Pallas

    cost = pl.CostEstimate(
        flops=2 * B * (input_dim * hid_p + hid_p * lat_p),
        transcendentals=B * latent_dim,
        bytes_accessed=(B * input_dim * 4                          # x (f32)
                        + (input_dim * hid_p + hid_p * lat_p) * 2  # weights (bf16)
                        + (hid_p + latent_dim) * 4                 # biases (f32)
                        + B * latent_dim * 4),                     # output (f32)
    )

    grid_spec = pl.GridSpec(
        grid=grid,
        in_specs=[
            pl.BlockSpec((batch_tile, input_dim), lambda i: (i, 0)),
            pl.BlockSpec((input_dim, hid_p), lambda i: (0, 0)),
            pl.BlockSpec((1, hid_p), lambda i: (0, 0)),
            pl.BlockSpec((hid_p, lat_p), lambda i: (0, 0)),
            pl.BlockSpec((1, latent_dim), lambda i: (0, 0)),
        ],
        out_specs=pl.BlockSpec((batch_tile, latent_dim), lambda i: (i, 0)),
    )

    return pl.pallas_call(
        encoder_kernel,
        out_shape=jax.ShapeDtypeStruct((B, latent_dim), jnp.float32),
        grid_spec=grid_spec,
        compiler_params=pltpu.CompilerParams(
            dimension_semantics=("parallel",),
            vmem_limit_bytes=budget,
        ),
        cost_estimate=cost,
    )(x, w1_p, b1_p, w2_p, b2_p)


def make_params(key, input_dim, hidden_dim, latent_dim):
    """Deterministic synthetic parameters (PyTorch-Linear-like uniform init),
    stored as [in, out] for the kernel (already transposed from [out, in])."""
    k1, k2, k3, k4 = jax.random.split(key, 4)
    lim1 = 1.0 / jnp.sqrt(input_dim)
    lim2 = 1.0 / jnp.sqrt(hidden_dim)
    w1 = jax.random.uniform(k1, (input_dim, hidden_dim), jnp.float32, -lim1, lim1)
    b1 = jax.random.uniform(k2, (hidden_dim,), jnp.float32, -lim1, lim1)
    w2 = jax.random.uniform(k3, (hidden_dim, latent_dim), jnp.float32, -lim2, lim2)
    b2 = jax.random.uniform(k4, (latent_dim,), jnp.float32, -lim2, lim2)
    return w1, b1, w2, b2


def reference_forward(x, w1, b1, w2, b2):
    h = jnp.maximum(x @ w1 + b1, 0.0)
    return jnp.tanh(h @ w2 + b2)


if __name__ == "__main__":
    # Small shapes consistent with the module defaults (hidden=100, latent=10).
    batch, input_dim, hidden_dim, latent_dim = 8, 32, 100, 10

    key = jax.random.PRNGKey(0)
    kx, kp = jax.random.split(key)
    x = jax.random.normal(kx, (batch, input_dim), jnp.float32)
    w1, b1, w2, b2 = make_params(kp, input_dim, hidden_dim, latent_dim)

    params = prepare_params(w1, b1, w2, b2)   # one-time prep (pad + bf16 cast)
    out = encoder_forward(x, params)
    out = jax.block_until_ready(out)

    ref = reference_forward(x, w1, b1, w2, b2)
    assert out.shape == (batch, latent_dim)
    # bf16 MXU operands (f32 accumulate) -> ~1e-2-level tolerance vs f32 ref.
    assert jnp.allclose(out, ref, atol=2e-2, rtol=2e-2), (
        float(jnp.max(jnp.abs(out - ref))))

    print("KERNEL_OK")
</pallas_src>

<mosaic_0001>
module attributes {stable_mosaic.version = 11 : i64} {
  func.func @encoder_kernel(%arg0: i32, %arg1: memref<8x32xf32, #tpu.memory_space<vmem>>, %arg2: memref<32x128xbf16, #tpu.memory_space<vmem>>, %arg3: memref<1x128xf32, #tpu.memory_space<vmem>>, %arg4: memref<128x128xbf16, #tpu.memory_space<vmem>>, %arg5: memref<1x10xf32, #tpu.memory_space<vmem>>, %arg6: memref<8x10xf32, #tpu.memory_space<vmem>>) attributes {dimension_semantics = [#tpu.dimension_semantics<parallel>], iteration_bounds = array<i64: 1>, scalar_prefetch = 0 : i64, scratch_operands = 0 : i64, tpu.core_type = #tpu.core_type<tc>, window_params = [{transform_indices = @transform_0, window_bounds = array<i64: 8, 32>}, {pipeline_mode = #tpu.pipeline_mode<synchronous>, transform_indices = @transform_1, window_bounds = array<i64: 32, 128>}, {pipeline_mode = #tpu.pipeline_mode<synchronous>, transform_indices = @transform_2, window_bounds = array<i64: 1, 128>}, {pipeline_mode = #tpu.pipeline_mode<synchronous>, transform_indices = @transform_3, window_bounds = array<i64: 128, 128>}, {pipeline_mode = #tpu.pipeline_mode<synchronous>, transform_indices = @transform_4, window_bounds = array<i64: 1, 10>}, {transform_indices = @transform_5, window_bounds = array<i64: 8, 10>}]} {
    %c0 = arith.constant 0 : index
    %c0_0 = arith.constant 0 : index
    %0 = vector.load %arg1[%c0, %c0_0] : memref<8x32xf32, #tpu.memory_space<vmem>>, vector<8x32xf32>
    %1 = arith.truncf %0 : vector<8x32xf32> to vector<8x32xbf16>
    %c0_1 = arith.constant 0 : index
    %c0_2 = arith.constant 0 : index
    %2 = vector.load %arg2[%c0_1, %c0_2] : memref<32x128xbf16, #tpu.memory_space<vmem>>, vector<32x128xbf16>
    %cst = arith.constant dense<0.000000e+00> : vector<8x128xf32>
    %3 = tpu.matmul %1, %2, %cst {dimension_numbers = #tpu.dot_dimension_numbers<[1], [0], [0], [1], [0, 0, 1, 1], [], []>} : vector<8x32xbf16>, vector<32x128xbf16>, vector<8x128xf32> -> vector<8x128xf32>
    %c0_3 = arith.constant 0 : index
    %c0_4 = arith.constant 0 : index
    %4 = vector.load %arg3[%c0_3, %c0_4] : memref<1x128xf32, #tpu.memory_space<vmem>>, vector<1x128xf32>
    %5 = vector.broadcast %4 : vector<1x128xf32> to vector<8x128xf32>
    %6 = arith.addf %3, %5 : vector<8x128xf32>
    %cst_5 = arith.constant 0.000000e+00 : f32
    %7 = vector.broadcast %cst_5 : f32 to vector<8x128xf32>
    %8 = arith.maximumf %6, %7 : vector<8x128xf32>
    %9 = arith.truncf %8 : vector<8x128xf32> to vector<8x128xbf16>
    %c0_6 = arith.constant 0 : index
    %c0_7 = arith.constant 0 : index
    %10 = vector.load %arg4[%c0_6, %c0_7] : memref<128x128xbf16, #tpu.memory_space<vmem>>, vector<128x128xbf16>
    %cst_8 = arith.constant dense<0.000000e+00> : vector<8x128xf32>
    %11 = tpu.matmul %9, %10, %cst_8 {dimension_numbers = #tpu.dot_dimension_numbers<[1], [0], [0], [1], [0, 0, 1, 1], [], []>} : vector<8x128xbf16>, vector<128x128xbf16>, vector<8x128xf32> -> vector<8x128xf32>
    %12 = vector.extract_strided_slice %11 {offsets = [0, 0], sizes = [8, 10], strides = [1, 1]} : vector<8x128xf32> to vector<8x10xf32>
    %c0_9 = arith.constant 0 : index
    %c0_10 = arith.constant 0 : index
    %13 = vector.load %arg5[%c0_9, %c0_10] : memref<1x10xf32, #tpu.memory_space<vmem>>, vector<1x10xf32>
    %14 = vector.broadcast %13 : vector<1x10xf32> to vector<8x10xf32>
    %15 = arith.addf %12, %14 : vector<8x10xf32>
    %16 = math.tanh %15 : vector<8x10xf32>
    %c0_11 = arith.constant 0 : index
    %c0_12 = arith.constant 0 : index
    %17 = vector.load %arg6[%c0_11, %c0_12] : memref<8x10xf32, #tpu.memory_space<vmem>>, vector<8x10xf32>
    tpu.vector_store %arg6[%c0_11, %c0_12], %16 {strides = array<i32>} : memref<8x10xf32, #tpu.memory_space<vmem>>, vector<8x10xf32>,
    return
  }
  func.func @transform_0(%arg0: i32) -> (i32, i32) {
    %c0_i32 = arith.constant 0 : i32
    %c0_i32_0 = arith.constant 0 : i32
    return %arg0, %c0_i32 : i32, i32
  }
  func.func @transform_1(%arg0: i32) -> (i32, i32) {
    %c0_i32 = arith.constant 0 : i32
    %c0_i32_0 = arith.constant 0 : i32
    %c0_i32_1 = arith.constant 0 : i32
    return %c0_i32, %c0_i32_0 : i32, i32
  }
  func.func @transform_2(%arg0: i32) -> (i32, i32) {
    %c0_i32 = arith.constant 0 : i32
    %c0_i32_0 = arith.constant 0 : i32
    %c0_i32_1 = arith.constant 0 : i32
    return %c0_i32, %c0_i32_0 : i32, i32
  }
  func.func @transform_3(%arg0: i32) -> (i32, i32) {
    %c0_i32 = arith.constant 0 : i32
    %c0_i32_0 = arith.constant 0 : i32
    %c0_i32_1 = arith.constant 0 : i32
    return %c0_i32, %c0_i32_0 : i32, i32
  }
  func.func @transform_4(%arg0: i32) -> (i32, i32) {
    %c0_i32 = arith.constant 0 : i32
    %c0_i32_0 = arith.constant 0 : i32
    %c0_i32_1 = arith.constant 0 : i32
    return %c0_i32, %c0_i32_0 : i32, i32
  }
  func.func @transform_5(%arg0: i32) -> (i32, i32) {
    %c0_i32 = arith.constant 0 : i32
    %c0_i32_0 = arith.constant 0 : i32
    return %arg0, %c0_i32 : i32, i32
  }
}

</mosaic_0001>

<llo_original>
// kernel: tpu_custom_call.1
$region0: #{tpu_custom_call.1}
  #allocation0 [shape = 'u32[]', space=smem, size = 0x4, offset = 0x4, fixed_abs, tag = 'smem constant byte address 0x4 - core index']
  #allocation1 [shape = 'u32[72,128]{1,0:T(1,128)}', space=vmem, size = 0x9000, scoped, tag = 'internal scratch']
  %s0 = inlined_call_operand.hbm [shape: f32[8,32], index: 0, kind: input, shape index: {}]
  %s1 = inlined_call_operand.hbm [shape: bf16[32,128], index: 1, kind: input, shape index: {}]
  %s2 = inlined_call_operand.vmem [shape: f32[1,128], index: 2, kind: input, shape index: {}]
  %s3 = inlined_call_operand.hbm [shape: bf16[128,128], index: 3, kind: input, shape index: {}]
  %s4 = inlined_call_operand.vmem [shape: f32[1,10], index: 4, kind: input, shape index: {}]
  %s5 = inlined_call_operand.hbm [shape: f32[8,10], index: 5, kind: output, shape index: {}]
  %s6 = sld [smem:[#allocation0]]
  $region42: #{tpu_custom_call.1} parent=0
    _
  %s8 = ssub.s32 1, %s6
  %s9 = scalar_select 0, %s8, %s6
  $region1: #{tpu_custom_call.1} parent=0
    #allocation2 [shape = 'u8[4096]{0}', space=vmem, size = 0x1000, scoped, tag = 'input window, operand 0, single buffered']
    #allocation3 [shape = 's32[1]{0}', space=sflag, size = 0x4, scoped, tag = 'scoped memory for tpu_custom_call.1']
    #allocation4 [shape = 's32[1]{0}', space=sflag, size = 0x4, scoped, tag = 'scoped memory for tpu_custom_call.1']
    #allocation5 [shape = 'u8[8192]{0}', space=vmem, size = 0x2000, scoped, tag = 'input window, operand 1, single buffered']
    #allocation6 [shape = 's32[1]{0}', space=sflag, size = 0x4, scoped, tag = 'scoped memory for tpu_custom_call.1']
    #allocation7 [shape = 'u8[32768]{0}', space=vmem, size = 0x8000, scoped, tag = 'input window, operand 3, single buffered']
    #allocation8 [shape = 'u8[4096]{0}', space=vmem, size = 0x1000, scoped, tag = 'output window, operand 0, single buffered']
    %10 = vsyncpa [#allocation3], 0
    %11 = vsyncpa [#allocation6], 0
    %12 = vsyncpa [#allocation4], 0
    // Predicated region
    $region2: #{tpu_custom_call.1} parent=1 // pred_check
      _
    $region3: #{tpu_custom_call.1} parent=1 // pred_check_branch
      %14 = sbr.rel (0) target = $region5
    $region4: #{tpu_custom_call.1} parent=1 // pred_region
      %16 = vsyncadd [#allocation3], 0
      %s18 = sshll.u32 %s0, 4
      %s19 = int_to_ptr.hbm [resolvable:$true] %s18
      %s20 = sshll.u32 [#allocation2], 4
      %s21 = int_to_ptr.vmem [resolvable:$true] %s20
      %23 = dma.hbm_to_vmem [thread:$0]  %s19, 128, %s21, [#allocation3]
    $region5: #{tpu_custom_call.1} parent=1 // pred_fallthru
      _
    // Predicated region
    $region6: #{tpu_custom_call.1} parent=1 // pred_check
      _
    $region7: #{tpu_custom_call.1} parent=1 // pred_check_branch
      %25 = sbr.rel (0) target = $region9
    $region8: #{tpu_custom_call.1} parent=1 // pred_region
      %27 = vsyncadd [#allocation6], 0
      %s28 = sshll.u32 %s1, 4
      %s29 = int_to_ptr.hbm [resolvable:$true] %s28
      %s30 = sshll.u32 [#allocation5], 4
      %s31 = int_to_ptr.vmem [resolvable:$true] %s30
      %36 = dma.hbm_to_vmem [thread:$0]  %s29, 256, %s31, [#allocation6], 64, 64, 4
    $region9: #{tpu_custom_call.1} parent=1 // pred_fallthru
      _
    // Predicated region
    $region10: #{tpu_custom_call.1} parent=1 // pred_check
      _
    $region11: #{tpu_custom_call.1} parent=1 // pred_check_branch
      %38 = sbr.rel (0) target = $region13
    $region12: #{tpu_custom_call.1} parent=1 // pred_region
      _
    $region13: #{tpu_custom_call.1} parent=1 // pred_fallthru
      _
    // Predicated region
    $region14: #{tpu_custom_call.1} parent=1 // pred_check
      _
    $region15: #{tpu_custom_call.1} parent=1 // pred_check_branch
      %40 = sbr.rel (0) target = $region17
    $region16: #{tpu_custom_call.1} parent=1 // pred_region
      %42 = vsyncadd [#allocation6], 0
      %s43 = sshll.u32 %s3, 4
      %s44 = int_to_ptr.hbm [resolvable:$true] %s43
      %s45 = sshll.u32 [#allocation7], 4
      %s46 = int_to_ptr.vmem [resolvable:$true] %s45
      %51 = dma.hbm_to_vmem [thread:$0]  %s44, 1024, %s46, [#allocation6], 64, 64, 4
    $region17: #{tpu_custom_call.1} parent=1 // pred_fallthru
      _
    // Predicated region
    $region18: #{tpu_custom_call.1} parent=1 // pred_check
      _
    $region19: #{tpu_custom_call.1} parent=1 // pred_check_branch
      %53 = sbr.rel (0) target = $region21
    $region20: #{tpu_custom_call.1} parent=1 // pred_region
      _
    $region21: #{tpu_custom_call.1} parent=1 // pred_fallthru
      _
    // Predicated region
    $region22: #{tpu_custom_call.1} parent=1 // pred_check
      _
    $region23: #{tpu_custom_call.1} parent=1 // pred_check_branch
      %55 = sbr.rel (0) target = $region25
    $region24: #{tpu_custom_call.1} parent=1 // pred_region
      %57 = dma.done [#allocation3], 128
    $region25: #{tpu_custom_call.1} parent=1 // pred_fallthru
      _
    // Predicated region
    $region26: #{tpu_custom_call.1} parent=1 // pred_check
      _
    $region27: #{tpu_custom_call.1} parent=1 // pred_check_branch
      %59 = sbr.rel (0) target = $region29
    $region28: #{tpu_custom_call.1} parent=1 // pred_region
      %61 = dma.done [#allocation6], 256
    $region29: #{tpu_custom_call.1} parent=1 // pred_fallthru
      _
    // Predicated region
    $region30: #{tpu_custom_call.1} parent=1 // pred_check
      _
    $region31: #{tpu_custom_call.1} parent=1 // pred_check_branch
      %63 = sbr.rel (0) target = $region33
    $region32: #{tpu_custom_call.1} parent=1 // pred_region
      %65 = dma.done [#allocation6], 1024
    $region33: #{tpu_custom_call.1} parent=1 // pred_fallthru
      _
    %v67 = vld [vmem:[#allocation2] sm:$0xff]
    %v68 = vpack.c.bf16 %v67, %v67
    %v69 = vld [vmem:[#allocation5] sm:$0xf]
    %v70 = vld [vmem:[#allocation5 + $0x4] sm:$0xf]
    %v71 = vld [vmem:[#allocation5 + $0x8] sm:$0xf]
    %v72 = vld [vmem:[#allocation5 + $0xc] sm:$0xf]
    %v73 = vld [vmem:[%s2] sm:$0x1]
    %v75 = vperm.slane %v73, 0
    %v81 = vunpack.c.l.b16 %v69
    %v82 = vunpack.c.l.b16 %v70
    %v83 = vunpack.c.l.b16 %v71
    %v84 = vunpack.c.l.b16 %v72
    %v85 = vpack.c.b16 %v82, %v81
    %v86 = vpack.c.b16 %v84, %v83
    %vm89 = vcmask 261120
    %v91 = vsel %vm89, %v68, 0
    %93 = vmatpush.bf16.msra.mxu0 0
    %94 = vmatpush.bf16.msra.mxu0 0
    %95 = vmatpush.bf16.msra.mxu0 0
    %96 = vmatpush.bf16.msra.mxu0 0
    %97 = vmatpush.bf16.msra.mxu0 0
    %98 = vmatpush.bf16.msra.mxu0 0
    %99 = vmatpush.bf16.msra.mxu0 %v86
    %100 = vmatpush.bf16.msra.mxu0 %v85
    %101 = vmatmul.bf16.gmra.mxu0 %v91
    %v102 = vpop.f32.mrf.mxu0
    %v103 = vadd.f32 %v75, %v102
    %v104 = vpop.f32.mrf.mxu0
    %105 = vdwg.mxu0
    %v106 = vmax.f32 %v103, 0.0
    %v107 = vpack.c.bf16 %v106, %v106
    %v108 = vld [vmem:[#allocation7] sm:$0xf]
    %v109 = vld [vmem:[#allocation7 + $0x4] sm:$0xf]
    %v110 = vld [vmem:[#allocation7 + $0x8] sm:$0xf]
    %v111 = vld [vmem:[#allocation7 + $0xc] sm:$0xf]
    %v112 = vld [vmem:[#allocation7 + $0x10] sm:$0xf]
    %v113 = vld [vmem:[#allocation7 + $0x14] sm:$0xf]
    %v114 = vld [vmem:[#allocation7 + $0x18] sm:$0xf]
    %v115 = vld [vmem:[#allocation7 + $0x1c] sm:$0xf]
    %v116 = vld [vmem:[#allocation7 + $0x20] sm:$0xf]
    %v117 = vld [vmem:[#allocation7 + $0x24] sm:$0xf]
    %v118 = vld [vmem:[#allocation7 + $0x28] sm:$0xf]
    %v119 = vld [vmem:[#allocation7 + $0x2c] sm:$0xf]
    %v120 = vld [vmem:[#allocation7 + $0x30] sm:$0xf]
    %v121 = vld [vmem:[#allocation7 + $0x34] sm:$0xf]
    %v122 = vld [vmem:[#allocation7 + $0x38] sm:$0xf]
    %v123 = vld [vmem:[#allocation7 + $0x3c] sm:$0xf]
    %v140 = vunpack.c.l.b16 %v108
    %v141 = vunpack.c.l.b16 %v109
    %v142 = vunpack.c.l.b16 %v110
    %v143 = vunpack.c.l.b16 %v111
    %v144 = vunpack.c.l.b16 %v112
    %v145 = vunpack.c.l.b16 %v113
    %v146 = vunpack.c.l.b16 %v114
    %v147 = vunpack.c.l.b16 %v115
    %v148 = vunpack.c.l.b16 %v116
    %v149 = vunpack.c.l.b16 %v117
    %v150 = vunpack.c.l.b16 %v118
    %v151 = vunpack.c.l.b16 %v119
    %v152 = vunpack.c.l.b16 %v120
    %v153 = vunpack.c.l.b16 %v121
    %v154 = vunpack.c.l.b16 %v122
    %v155 = vunpack.c.l.b16 %v123
    %v156 = vpack.c.b16 %v141, %v140
    %v157 = vpack.c.b16 %v143, %v142
    %v158 = vpack.c.b16 %v145, %v144
    %v159 = vpack.c.b16 %v147, %v146
    %v160 = vpack.c.b16 %v149, %v148
    %v161 = vpack.c.b16 %v151, %v150
    %v162 = vpack.c.b16 %v153, %v152
    %v163 = vpack.c.b16 %v155, %v154
    %172 = vmatpush.bf16.msra.mxu0 %v163
    %173 = vmatpush.bf16.msra.mxu0 %v162
    %174 = vmatpush.bf16.msra.mxu0 %v161
    %175 = vmatpush.bf16.msra.mxu0 %v160
    %176 = vmatpush.bf16.msra.mxu0 %v159
    %177 = vmatpush.bf16.msra.mxu0 %v158
    %178 = vmatpush.bf16.msra.mxu0 %v157
    %179 = vmatpush.bf16.msra.mxu0 %v156
    %180 = vmatmul.bf16.gmra.mxu0 %v107
    %v181 = vpop.f32.mrf.mxu0
    %v182 = vadd.f32 0.0, %v181
    %v183 = vpop.f32.mrf.mxu0
    %184 = vdwg.mxu0
    %v185 = vld [vmem:[%s4] sm:$0x1]
    %v187 = vperm.slane %v185, 0
    %v189 = vadd.f32 %v182, %v187
    %v190 = vtanh.pop %v189
    %vm191 = vcmask 80896
    %192 = vst.msk [vmem:[#allocation8] sm:$0xff] %vm191, %v190
    // Predicated region
    $region34: #{tpu_custom_call.1} parent=1 // pred_check
      _
    $region35: #{tpu_custom_call.1} parent=1 // pred_check_branch
      %194 = sbr.rel (0) target = $region37
    $region36: #{tpu_custom_call.1} parent=1 // pred_region
      %196 = vsyncadd [#allocation4], 0
      %s198 = sshll.u32 [#allocation8], 4
      %s199 = int_to_ptr.vmem [resolvable:$true] %s198
      %s200 = sshll.u32 %s5, 4
      %s201 = int_to_ptr.hbm [resolvable:$true] %s200
      %203 = dma.vmem_to_hbm [thread:$0]  %s199, 128, %s201, [#allocation4]
    $region37: #{tpu_custom_call.1} parent=1 // pred_fallthru
      _
    // Predicated region
    $region38: #{tpu_custom_call.1} parent=1 // pred_check
      _
    $region39: #{tpu_custom_call.1} parent=1 // pred_check_branch
      %205 = sbr.rel (0) target = $region41
    $region40: #{tpu_custom_call.1} parent=1 // pred_region
      %207 = dma.done [#allocation4], 128
    $region41: #{tpu_custom_call.1} parent=1 // pred_fallthru
      _
    %208 = vsyncpa [#allocation3], 1
    %209 = vsyncpa [#allocation6], 1
    %210 = vsyncpa [#allocation4], 1

</llo_original>
